<compile_context>
chip_gen: v7x
topology: tpu7x:2x2x1
jax: 0.10.0
libtpu: 0.0.40
codegen_flags: <defaults>
</compile_context>

<pallas_src>
import functools
import math

import jax
import jax.numpy as jnp
from jax.experimental import pallas as pl
from jax.experimental.pallas import tpu as pltpu

PAD_ID = 1
NEG_INF = -1e9


def _round_up(x, m):
    return (x + m - 1) // m * m


def _tile_and_pad(dim, preferred, align):
    """Full dim (no padding) if it fits one tile, else an aligned tile + padded dim."""
    if dim <= preferred:
        return dim, dim
    tile = max(align, (preferred // align) * align)
    return tile, _round_up(dim, tile)


# ----------------------------------------------------------------------------
# Tiled matmul (optional fused bias + tanh epilogue)
# ----------------------------------------------------------------------------
def _matmul_kernel(a_ref, b_ref, o_ref, acc_ref, *, apply_tanh):
    @pl.when(pl.program_id(2) == 0)
    def _():
        acc_ref[...] = jnp.zeros_like(acc_ref)

    acc_ref[...] += jnp.dot(a_ref[...], b_ref[...],
                            preferred_element_type=jnp.float32)

    @pl.when(pl.program_id(2) == pl.num_programs(2) - 1)
    def _():
        r = acc_ref[...]
        if apply_tanh:
            r = jnp.tanh(r)
        o_ref[...] = r.astype(o_ref.dtype)


def _matmul_bias_kernel(a_ref, b_ref, bias_ref, o_ref, acc_ref, *, apply_tanh):
    @pl.when(pl.program_id(2) == 0)
    def _():
        acc_ref[...] = jnp.zeros_like(acc_ref)

    acc_ref[...] += jnp.dot(a_ref[...], b_ref[...],
                            preferred_element_type=jnp.float32)

    @pl.when(pl.program_id(2) == pl.num_programs(2) - 1)
    def _():
        r = acc_ref[...] + bias_ref[...]
        if apply_tanh:
            r = jnp.tanh(r)
        o_ref[...] = r.astype(o_ref.dtype)


def pallas_matmul(a, b, bias=None, *, out_dtype=jnp.float32, apply_tanh=False,
                  tm=256, tn=512, tk=512):
    """[M, K] @ [K, N] (+ bias, tanh) -> [M, N]; MXU tiles + f32 VMEM accumulator."""
    M, K = a.shape
    K2, N = b.shape
    assert K == K2
    tm_, Mp = _tile_and_pad(M, tm, 8)
    tn_, Np = _tile_and_pad(N, tn, 128)
    tk_, Kp = _tile_and_pad(K, tk, 128)
    if (Mp, Kp) != (M, K):
        a = jnp.pad(a, ((0, Mp - M), (0, Kp - K)))
    if (Kp, Np) != (K, N):
        b = jnp.pad(b, ((0, Kp - K), (0, Np - N)))

    in_specs = [pl.BlockSpec((tm_, tk_), lambda i, j, k: (i, k)),
                pl.BlockSpec((tk_, tn_), lambda i, j, k: (k, j))]
    args = [a, b]
    if bias is None:
        kern = functools.partial(_matmul_kernel, apply_tanh=apply_tanh)
    else:
        bias = bias.reshape(1, N).astype(jnp.float32)
        if Np != N:
            bias = jnp.pad(bias, ((0, 0), (0, Np - N)))
        in_specs.append(pl.BlockSpec((1, tn_), lambda i, j, k: (0, j)))
        args.append(bias)
        kern = functools.partial(_matmul_bias_kernel, apply_tanh=apply_tanh)

    out = pl.pallas_call(
        kern,
        out_shape=jax.ShapeDtypeStruct((Mp, Np), out_dtype),
        grid=(Mp // tm_, Np // tn_, Kp // tk_),
        in_specs=in_specs,
        out_specs=pl.BlockSpec((tm_, tn_), lambda i, j, k: (i, j)),
        scratch_shapes=[pltpu.VMEM((tm_, tn_), jnp.float32)],
        compiler_params=pltpu.CompilerParams(
            dimension_semantics=("parallel", "parallel", "arbitrary")),
    )(*args)
    if (Mp, Np) != (M, N):
        out = out[:M, :N]
    return out


# ----------------------------------------------------------------------------
# Encoder attention: probs only (context is never used by the wrapper)
# ----------------------------------------------------------------------------
def _enc_attn_probs_kernel(ids_row_ref, ids_col_ref, q_ref, k_ref, p_ref, *, scale):
    q = q_ref[0]                                  # (S, D) bf16
    k = k_ref[0]                                  # (S, D) bf16
    s = jax.lax.dot_general(q, k, (((1,), (1,)), ((), ())),
                            preferred_element_type=jnp.float32) * scale
    key_ok = ids_row_ref[0] != PAD_ID             # (1, S)
    qry_ok = ids_col_ref[0] != PAD_ID             # (S, 1)
    mask = jnp.logical_and(qry_ok, key_ok)        # (S, S), built in-kernel
    s = jnp.where(mask, s, NEG_INF)
    s_max = jnp.max(s, axis=-1, keepdims=True)
    e = jnp.exp(s - s_max)
    # exact divide on this path: the probs are a returned value
    p_ref[0] = e / jnp.sum(e, axis=-1, keepdims=True)


def pallas_encoder_attention_probs(q, k, source_ids):
    """Masked self-attention probabilities only. -> [B, S, S] float32."""
    B, S, D = q.shape
    kern = functools.partial(_enc_attn_probs_kernel, scale=1.0 / math.sqrt(D))
    ids_row = source_ids.reshape(B, 1, S).astype(jnp.int32)
    ids_col = source_ids.reshape(B, S, 1).astype(jnp.int32)
    return pl.pallas_call(
        kern,
        out_shape=jax.ShapeDtypeStruct((B, S, S), jnp.float32),
        grid=(B,),
        in_specs=[
            pl.BlockSpec((1, 1, S), lambda b: (b, 0, 0)),
            pl.BlockSpec((1, S, 1), lambda b: (b, 0, 0)),
            pl.BlockSpec((1, S, D), lambda b: (b, 0, 0)),
            pl.BlockSpec((1, S, D), lambda b: (b, 0, 0)),
        ],
        out_specs=pl.BlockSpec((1, S, S), lambda b: (b, 0, 0)),
        compiler_params=pltpu.CompilerParams(dimension_semantics=("parallel",)),
    )(ids_row, ids_col, q, k)


# ----------------------------------------------------------------------------
# Decoder attention: context only (probs never used), causal+pad mask in-kernel
# ----------------------------------------------------------------------------
def _dec_attn_kernel(ids_ref, q_ref, k_ref, v_ref, o_ref, *, scale, src_len, q_block):
    qb = pl.program_id(1)
    q = q_ref[0]                                  # (tq, D) bf16
    k = k_ref[0]                                  # (Tk, D) bf16
    v = v_ref[0]                                  # (Tk, D) bf16
    s = jax.lax.dot_general(q, k, (((1,), (1,)), ((), ())),
                            preferred_element_type=jnp.float32) * scale
    row = jax.lax.broadcasted_iota(jnp.int32, s.shape, 0) + qb * q_block + src_len
    col = jax.lax.broadcasted_iota(jnp.int32, s.shape, 1)
    key_ok = ids_ref[0] != PAD_ID                 # (1, Tk)
    mask = jnp.logical_and(col <= row, key_ok)    # causal slice & key padding
    s = jnp.where(mask, s, NEG_INF)
    s_max = jnp.max(s, axis=-1, keepdims=True)
    e = jnp.exp(s - s_max)
    p = e * pl.reciprocal(jnp.sum(e, axis=-1, keepdims=True), approx=True)
    ctx = jax.lax.dot_general(p.astype(v.dtype), v, (((1,), (0,)), ((), ())),
                              preferred_element_type=jnp.float32)
    o_ref[0] = ctx.astype(o_ref.dtype)


def pallas_decoder_attention(q, k, v, ids_all, *, src_len,
                             out_dtype=jnp.bfloat16, q_block=256):
    B, T, D = q.shape
    Tk = k.shape[1]
    if T <= q_block:
        tq = T
    elif T % q_block == 0:
        tq = q_block
    elif T % 128 == 0:
        tq = 128
    else:
        tq = T
    kern = functools.partial(_dec_attn_kernel, scale=1.0 / math.sqrt(D),
                             src_len=src_len, q_block=tq)
    ids_row = ids_all.reshape(B, 1, Tk).astype(jnp.int32)
    return pl.pallas_call(
        kern,
        out_shape=jax.ShapeDtypeStruct((B, T, D), out_dtype),
        grid=(B, T // tq),
        in_specs=[
            pl.BlockSpec((1, 1, Tk), lambda b, i: (b, 0, 0)),
            pl.BlockSpec((1, tq, D), lambda b, i: (b, i, 0)),
            pl.BlockSpec((1, Tk, D), lambda b, i: (b, 0, 0)),
            pl.BlockSpec((1, Tk, D), lambda b, i: (b, 0, 0)),
        ],
        out_specs=pl.BlockSpec((1, tq, D), lambda b, i: (b, i, 0)),
        compiler_params=pltpu.CompilerParams(
            dimension_semantics=("parallel", "parallel")),
    )(ids_row, q, k, v)


# ----------------------------------------------------------------------------
# Fused tied lm_head + shifted masked cross-entropy (online softmax over vocab)
# ----------------------------------------------------------------------------
def _lmhead_ce_kernel(h_ref, w_ref, lbl_ref, msk_ref, out_ref,
                      m_ref, l_ref, pick_ref, acc_ref, *, vocab_size):
    i = pl.program_id(0)
    j = pl.program_id(1)
    nv = pl.num_programs(1)

    @pl.when(jnp.logical_and(i == 0, j == 0))
    def _():
        acc_ref[...] = jnp.zeros_like(acc_ref)

    @pl.when(j == 0)
    def _():
        m_ref[...] = jnp.full_like(m_ref, -jnp.inf)
        l_ref[...] = jnp.zeros_like(l_ref)
        pick_ref[...] = jnp.zeros_like(pick_ref)

    tv = w_ref.shape[0]
    # logits tile (tm, tv): contract on the LAST dim of both operands so the
    # [V, H] tied embedding is consumed un-transposed (no emb.T copy in HBM).
    logits = jax.lax.dot_general(h_ref[...], w_ref[...],
                                 (((1,), (1,)), ((), ())),
                                 preferred_element_type=jnp.float32)
    col = j * tv + jax.lax.broadcasted_iota(jnp.int32, logits.shape, 1)
    valid = col < vocab_size                       # mask ragged last vocab tile
    masked = jnp.where(valid, logits, -1e30)

    labels = lbl_ref[...]                          # (tm, 1) int32
    pick_ref[...] += jnp.sum(jnp.where(col == labels, logits, 0.0),
                             axis=-1, keepdims=True)

    m_prev = m_ref[...]
    m_new = jnp.maximum(m_prev, jnp.max(masked, axis=-1, keepdims=True))
    l_ref[...] = (jnp.exp(m_prev - m_new) * l_ref[...]
                  + jnp.sum(jnp.exp(masked - m_new), axis=-1, keepdims=True))
    m_ref[...] = m_new

    @pl.when(j == nv - 1)
    def _():
        nll = m_ref[...] + jnp.log(l_ref[...]) - pick_ref[...]   # (tm, 1)
        acc_ref[...] += nll * msk_ref[...]

    @pl.when(jnp.logical_and(i == pl.num_programs(0) - 1, j == nv - 1))
    def _():
        out_ref[...] = jnp.sum(acc_ref[...], axis=0, keepdims=True)


def pallas_lmhead_ce_loss_sum(hidden, emb, labels, active_mask, *,
                              row_tile=256, vocab_tile=512):
    """sum_t active[t] * NLL(softmax(hidden[t] @ emb^T), labels[t]) -> (1,1) f32.

    The [N, V] logits are never materialized in HBM (online softmax over vocab tiles).
    """
    N, H = hidden.shape
    V = emb.shape[0]
    tm, Np = _tile_and_pad(N, row_tile, 8)
    if Np != N:
        hidden = jnp.pad(hidden, ((0, Np - N), (0, 0)))
        labels = jnp.pad(labels, (0, Np - N))
        active_mask = jnp.pad(active_mask, (0, Np - N))
    tv = V if V <= vocab_tile else vocab_tile
    nv = pl.cdiv(V, tv)

    kern = functools.partial(_lmhead_ce_kernel, vocab_size=V)
    return pl.pallas_call(
        kern,
        out_shape=jax.ShapeDtypeStruct((1, 1), jnp.float32),
        grid=(Np // tm, nv),
        in_specs=[
            pl.BlockSpec((tm, H), lambda i, j: (i, 0)),
            pl.BlockSpec((tv, H), lambda i, j: (j, 0)),
            pl.BlockSpec((tm, 1), lambda i, j: (i, 0)),
            pl.BlockSpec((tm, 1), lambda i, j: (i, 0)),
        ],
        out_specs=pl.BlockSpec((1, 1), lambda i, j: (0, 0)),
        scratch_shapes=[pltpu.VMEM((tm, 1), jnp.float32) for _ in range(4)],
        compiler_params=pltpu.CompilerParams(
            dimension_semantics=("arbitrary", "arbitrary")),
    )(hidden.astype(jnp.bfloat16),
      emb.astype(jnp.bfloat16),
      labels.reshape(Np, 1).astype(jnp.int32),
      active_mask.reshape(Np, 1).astype(jnp.float32))


# ----------------------------------------------------------------------------
# Model (stand-in encoder / decoder + Seq2Seq forward)
# ----------------------------------------------------------------------------
def init_params(key, vocab_size, hidden_size):
    k1, k2, k3 = jax.random.split(key, 3)
    scale = 1.0 / math.sqrt(hidden_size)
    return {
        # tied word embedding == lm_head weight
        "emb": jax.random.normal(k1, (vocab_size, hidden_size), jnp.float32) * scale,
        # fused Q|K|V projection weight
        "wqkv": jax.random.normal(k2, (hidden_size, 3 * hidden_size), jnp.float32) * scale,
        "wdense": jax.random.normal(k3, (hidden_size, hidden_size), jnp.float32) * scale,
        "bdense": jnp.zeros((hidden_size,), jnp.float32),
    }


def project_qkv(hidden_bf16, wqkv_bf16):
    """Single fused [M, H] @ [H, 3H] projection; one activation read, one launch."""
    B, S, H = hidden_bf16.shape
    flat = hidden_bf16.reshape(B * S, H)
    qkv = pallas_matmul(flat, wqkv_bf16, out_dtype=jnp.bfloat16).reshape(B, S, 3 * H)
    return qkv[..., :H], qkv[..., H:2 * H], qkv[..., 2 * H:]


def seq2seq_forward(params, source_ids, target_ids):
    """Mirrors Seq2Seq.forward training branch (target_ids given)."""
    B, S = source_ids.shape
    T = target_ids.shape[1]
    V, H = params["emb"].shape

    # bf16 copies of the weights feed every MXU dot; f32 masters stay untouched.
    emb_bf = params["emb"].astype(jnp.bfloat16)
    wqkv_bf = params["wqkv"].astype(jnp.bfloat16)
    wdense_bf = params["wdense"].astype(jnp.bfloat16)

    # ---- encoder (stand-in: 1-layer / 1-head; mask = src.ne(1) outer product) ----
    src_hidden = emb_bf[source_ids]                          # [B,S,H] (XLA gather)
    q_s, k_s, v_s = project_qkv(src_hidden, wqkv_bf)
    enc_probs = pallas_encoder_attention_probs(q_s, k_s, source_ids)   # [B,S,S]
    encoder_attention = (enc_probs[:, None, :, :],)          # per-layer [B,heads,S,S]

    # ---- decoder (stand-in): causal bias slice + key-padding over concat ids ----
    tgt_hidden = emb_bf[target_ids]
    q_t, k_t, v_t = project_qkv(tgt_hidden, wqkv_bf)
    k_all = jnp.concatenate([k_s, k_t], axis=1)              # use_cache-style reuse
    v_all = jnp.concatenate([v_s, v_t], axis=1)
    ids_all = jnp.concatenate([source_ids, target_ids], axis=-1)
    dec_out = pallas_decoder_attention(q_t, k_all, v_all, ids_all, src_len=S)

    # ---- hidden_states = tanh(dense(out))  (bias + tanh fused in the epilogue) ---
    hidden_states = pallas_matmul(dec_out.reshape(B * T, H), wdense_bf,
                                  bias=params["bdense"], apply_tanh=True,
                                  out_dtype=jnp.bfloat16)     # [B*T, H]

    # ---- fused tied lm_head + shifted masked cross-entropy -----------------------
    hs = hidden_states.reshape(B, T, H)[:, :-1, :].reshape(B * (T - 1), H)
    shift_labels = target_ids[:, 1:].reshape(-1)
    active = (target_ids[:, 1:] != PAD_ID).reshape(-1)        # stand-in target_mask
    loss_sum = pallas_lmhead_ce_loss_sum(hs, emb_bf, shift_labels, active)
    active_sum = jnp.sum(active.astype(jnp.int32))
    loss = loss_sum[0, 0] / jnp.maximum(active_sum.astype(jnp.float32), 1.0)

    # TODO(synk): beam-search inference branch (Beam class) is Python-side
    # data-dependent control flow with no clean Pallas equivalent; only the
    # training branch is implemented here.
    struc_loss = jnp.float32(0.0)

    return (loss, struc_loss, loss * active_sum, active_sum, encoder_attention)


# ----------------------------------------------------------------------------
if __name__ == "__main__":
    B, S, T, H, V = 2, 8, 8, 32, 64

    key = jax.random.PRNGKey(0)
    kp, ks, kt = jax.random.split(key, 3)
    params = init_params(kp, V, H)

    source_ids = jax.random.randint(ks, (B, S), 2, V, dtype=jnp.int32)
    target_ids = jax.random.randint(kt, (B, T), 2, V, dtype=jnp.int32)
    # introduce padding (id == 1) to exercise the masks
    source_ids = source_ids.at[1, -2:].set(PAD_ID)
    target_ids = target_ids.at[0, -3:].set(PAD_ID)
    target_ids = target_ids.at[1, -1:].set(PAD_ID)

    outputs = seq2seq_forward(params, source_ids, target_ids)
    outputs = jax.block_until_ready(outputs)

    loss, struc_loss, weighted_loss, active_sum, enc_attn = outputs
    assert loss.shape == () and jnp.isfinite(loss)
    assert struc_loss.shape == ()
    assert enc_attn[0].shape == (B, 1, S, S)
    # attention rows over non-masked keys sum to 1
    assert jnp.allclose(jnp.sum(enc_attn[0][0, 0], axis=-1), 1.0, atol=1e-5)

    print("KERNEL_OK")
</pallas_src>

<mosaic_0001>
module attributes {stable_mosaic.version = 11 : i64} {
  func.func @_matmul_kernel(%arg0: i32, %arg1: i32, %arg2: i32, %arg3: memref<16x32xbf16, #tpu.memory_space<vmem>>, %arg4: memref<32x96xbf16, #tpu.memory_space<vmem>>, %arg5: memref<16x96xbf16, #tpu.memory_space<vmem>>, %arg6: memref<16x96xf32, #tpu.memory_space<vmem>>) attributes {dimension_semantics = [#tpu.dimension_semantics<parallel>, #tpu.dimension_semantics<parallel>, #tpu.dimension_semantics<arbitrary>], iteration_bounds = array<i64: 1, 1, 1>, scalar_prefetch = 0 : i64, scratch_operands = 1 : i64, tpu.core_type = #tpu.core_type<tc>, window_params = [{transform_indices = @transform_0, window_bounds = array<i64: 16, 32>}, {transform_indices = @transform_1, window_bounds = array<i64: 32, 96>}, {transform_indices = @transform_2, window_bounds = array<i64: 16, 96>}]} {
    %c0_i32 = arith.constant 0 : i32
    %0 = arith.cmpi eq, %arg2, %c0_i32 : i32
    %1 = arith.extui %0 : i1 to i32
    %c0_i32_0 = arith.constant 0 : i32
    %2 = arith.cmpi ne, %1, %c0_i32_0 : i32
    scf.if %2 {
      %cst_10 = arith.constant 0.000000e+00 : f32
      %12 = vector.broadcast %cst_10 : f32 to vector<16x96xf32>
      %c0_11 = arith.constant 0 : index
      %c0_12 = arith.constant 0 : index
      %13 = vector.load %arg6[%c0_11, %c0_12] : memref<16x96xf32, #tpu.memory_space<vmem>>, vector<16x96xf32>
      tpu.vector_store %arg6[%c0_11, %c0_12], %12 {strides = array<i32>} : memref<16x96xf32, #tpu.memory_space<vmem>>, vector<16x96xf32>,
    } else {
    }
    %c0 = arith.constant 0 : index
    %c0_1 = arith.constant 0 : index
    %3 = vector.load %arg6[%c0, %c0_1] : memref<16x96xf32, #tpu.memory_space<vmem>>, vector<16x96xf32>
    %c0_2 = arith.constant 0 : index
    %c0_3 = arith.constant 0 : index
    %4 = vector.load %arg3[%c0_2, %c0_3] : memref<16x32xbf16, #tpu.memory_space<vmem>>, vector<16x32xbf16>
    %c0_4 = arith.constant 0 : index
    %c0_5 = arith.constant 0 : index
    %5 = vector.load %arg4[%c0_4, %c0_5] : memref<32x96xbf16, #tpu.memory_space<vmem>>, vector<32x96xbf16>
    %cst = arith.constant dense<0.000000e+00> : vector<16x96xf32>
    %6 = tpu.matmul %4, %5, %cst {dimension_numbers = #tpu.dot_dimension_numbers<[1], [0], [0], [1], [0, 0, 1, 1], [], []>} : vector<16x32xbf16>, vector<32x96xbf16>, vector<16x96xf32> -> vector<16x96xf32>
    %7 = arith.addf %3, %6 : vector<16x96xf32>
    %c0_6 = arith.constant 0 : index
    %c0_7 = arith.constant 0 : index
    %8 = vector.load %arg6[%c0_6, %c0_7] : memref<16x96xf32, #tpu.memory_space<vmem>>, vector<16x96xf32>
    tpu.vector_store %arg6[%c0_6, %c0_7], %7 {strides = array<i32>} : memref<16x96xf32, #tpu.memory_space<vmem>>, vector<16x96xf32>,
    %c0_i32_8 = arith.constant 0 : i32
    %9 = arith.cmpi eq, %arg2, %c0_i32_8 : i32
    %10 = arith.extui %9 : i1 to i32
    %c0_i32_9 = arith.constant 0 : i32
    %11 = arith.cmpi ne, %10, %c0_i32_9 : i32
    scf.if %11 {
      %c0_10 = arith.constant 0 : index
      %c0_11 = arith.constant 0 : index
      %12 = vector.load %arg6[%c0_10, %c0_11] : memref<16x96xf32, #tpu.memory_space<vmem>>, vector<16x96xf32>
      %13 = arith.truncf %12 : vector<16x96xf32> to vector<16x96xbf16>
      %c0_12 = arith.constant 0 : index
      %c0_13 = arith.constant 0 : index
      %14 = vector.load %arg5[%c0_12, %c0_13] : memref<16x96xbf16, #tpu.memory_space<vmem>>, vector<16x96xbf16>
      tpu.vector_store %arg5[%c0_12, %c0_13], %13 {strides = array<i32>} : memref<16x96xbf16, #tpu.memory_space<vmem>>, vector<16x96xbf16>,
    } else {
    }
    return
  }
  func.func @transform_0(%arg0: i32, %arg1: i32, %arg2: i32) -> (i32, i32) {
    %c0_i32 = arith.constant 0 : i32
    return %arg0, %arg2 : i32, i32
  }
  func.func @transform_1(%arg0: i32, %arg1: i32, %arg2: i32) -> (i32, i32) {
    %c0_i32 = arith.constant 0 : i32
    return %arg2, %arg1 : i32, i32
  }
  func.func @transform_2(%arg0: i32, %arg1: i32, %arg2: i32) -> (i32, i32) {
    %c0_i32 = arith.constant 0 : i32
    return %arg0, %arg1 : i32, i32
  }
}

</mosaic_0001>

<llo_original>
// kernel: tpu_custom_call.1
$region0: #{tpu_custom_call.1}
  #allocation0 [shape = 'u32[]', space=smem, size = 0x4, offset = 0x4, fixed_abs, tag = 'smem constant byte address 0x4 - core index']
  #allocation1 [shape = 'u32[144,128]{1,0:T(1,128)}', space=vmem, size = 0x12000, scoped, tag = 'internal scratch']
  #allocation2 [shape = 'f32[16,96]{1,0:T(8,128)}', space=vmem, size = 0x2000, scoped, tag = 'scratch operand']
  %s0 = inlined_call_operand.hbm [shape: bf16[16,32], index: 0, kind: input, shape index: {}]
  %s1 = inlined_call_operand.hbm [shape: bf16[32,96], index: 1, kind: input, shape index: {}]
  %s2 = inlined_call_operand.hbm [shape: bf16[16,96], index: 2, kind: output, shape index: {}]
  %s3 = sld [smem:[#allocation0]]
  $region34: #{tpu_custom_call.1} parent=0
    _
  %s5 = ssub.s32 1, %s3
  %s6 = scalar_select 0, %s5, %s3
  $region1: #{tpu_custom_call.1} parent=0
    #allocation3 [shape = 'u8[4096]{0}', space=vmem, size = 0x1000, scoped, tag = 'input window, operand 0, single buffered']
    #allocation4 [shape = 's32[1]{0}', space=sflag, size = 0x4, scoped, tag = 'scoped memory for tpu_custom_call.1']
    #allocation5 [shape = 's32[1]{0}', space=sflag, size = 0x4, scoped, tag = 'scoped memory for tpu_custom_call.1']
    #allocation6 [shape = 'u8[8192]{0}', space=vmem, size = 0x2000, scoped, tag = 'input window, operand 1, single buffered']
    #allocation7 [shape = 's32[1]{0}', space=sflag, size = 0x4, scoped, tag = 'scoped memory for tpu_custom_call.1']
    #allocation8 [shape = 'u8[4096]{0}', space=vmem, size = 0x1000, scoped, tag = 'output window, operand 0, single buffered']
    %7 = vsyncpa [#allocation4], 0
    %8 = vsyncpa [#allocation7], 0
    %9 = vsyncpa [#allocation5], 0
    // Predicated region
    $region2: #{tpu_custom_call.1} parent=1 // pred_check
      _
    $region3: #{tpu_custom_call.1} parent=1 // pred_check_branch
      %11 = sbr.rel (0) target = $region5
    $region4: #{tpu_custom_call.1} parent=1 // pred_region
      %s13 = ssub.s32 128, 128
      %14 = vsyncadd [#allocation4], %s13
      %s15 = sshll.u32 [#allocation3], 4
      %s16 = int_to_ptr.vmem [resolvable:$true] %s15
      %21 = dma.hbm_to_vmem [thread:$0]  %s0, 128, %s16, [#allocation4], 64, 64, 4
    $region5: #{tpu_custom_call.1} parent=1 // pred_fallthru
      _
    // Predicated region
    $region6: #{tpu_custom_call.1} parent=1 // pred_check
      _
    $region7: #{tpu_custom_call.1} parent=1 // pred_check_branch
      %23 = sbr.rel (0) target = $region9
    $region8: #{tpu_custom_call.1} parent=1 // pred_region
      %s25 = ssub.s32 256, 256
      %26 = vsyncadd [#allocation7], %s25
      %s27 = sshll.u32 [#allocation6], 4
      %s28 = int_to_ptr.vmem [resolvable:$true] %s27
      %33 = dma.hbm_to_vmem [thread:$0]  %s1, 256, %s28, [#allocation7], 64, 64, 4
    $region9: #{tpu_custom_call.1} parent=1 // pred_fallthru
      _
    // Predicated region
    $region10: #{tpu_custom_call.1} parent=1 // pred_check
      _
    $region11: #{tpu_custom_call.1} parent=1 // pred_check_branch
      %35 = sbr.rel (0) target = $region13
    $region12: #{tpu_custom_call.1} parent=1 // pred_region
      %36 = dma.done [#allocation4], 128
    $region13: #{tpu_custom_call.1} parent=1 // pred_fallthru
      _
    // Predicated region
    $region14: #{tpu_custom_call.1} parent=1 // pred_check
      _
    $region15: #{tpu_custom_call.1} parent=1 // pred_check_branch
      %38 = sbr.rel (0) target = $region17
    $region16: #{tpu_custom_call.1} parent=1 // pred_region
      %39 = dma.done [#allocation7], 256
    $region17: #{tpu_custom_call.1} parent=1 // pred_fallthru
      _
    %p41 = scmp.eq.s32.totalorder 0, 0
    // Predicated region
    $region18: #{tpu_custom_call.1} parent=1 // pred_check
      %p42 = pneg %p41
    $region19: #{tpu_custom_call.1} parent=1 // pred_check_branch
      %44 = sbr.rel (%p42) target = $region21
    $region20: #{tpu_custom_call.1} parent=1 // pred_region
      %vm45 = vcmask 785408
      %46 = vst.msk [vmem:[#allocation2] sm:$0xff] %vm45, 0.0
      %47 = vst.msk [vmem:[#allocation2 + $0x8] sm:$0xff] %vm45, 0.0
    $region21: #{tpu_custom_call.1} parent=1 // pred_fallthru
      _
    %v48 = vld [vmem:[#allocation2] sm:$0xff]
    %v49 = vld [vmem:[#allocation2 + $0x8] sm:$0xff]
    %v50 = vld [vmem:[#allocation3] sm:$0xf]
    %v51 = vld [vmem:[#allocation3 + $0x4] sm:$0xf]
    %v52 = vld [vmem:[#allocation6] sm:$0xf]
    %v53 = vld [vmem:[#allocation6 + $0x4] sm:$0xf]
    %v54 = vld [vmem:[#allocation6 + $0x8] sm:$0xf]
    %v55 = vld [vmem:[#allocation6 + $0xc] sm:$0xf]
    %v58 = vunpack.c.l.b16 %v50
    %v59 = vunpack.c.l.b16 %v51
    %v60 = vpack.c.b16 %v59, %v58
    %v65 = vunpack.c.l.b16 %v52
    %v66 = vunpack.c.l.b16 %v53
    %v67 = vunpack.c.l.b16 %v54
    %v68 = vunpack.c.l.b16 %v55
    %v69 = vpack.c.b16 %v66, %v65
    %v70 = vpack.c.b16 %v68, %v67
    %vm73 = vcmask 261120
    %v75 = vsel %vm73, %v60, 0
    %77 = vmatprep.subr.bf16.mxu0 0
    %78 = vmatpush1.bf16.msra.mxu0 %v69
    %79 = vmatprep.subr.bf16.mxu0 0
    %80 = vmatpush1.bf16.msra.mxu0 %v70
    %81 = vmatprep.subr.bf16.mxu0 0
    %82 = vmatpush1.bf16.msra.mxu0 0
    %83 = vmatprep.subr.bf16.mxu0 0
    %84 = vmatpush1.bf16.msra.mxu0 0
    %85 = vmatprep.subr.bf16.mxu0 0
    %86 = vmatpush1.bf16.msra.mxu0 0
    %87 = vmatprep.subr.bf16.mxu0 0
    %88 = vmatpush1.bf16.msra.mxu0 0
    %89 = vmatprep.subr.bf16.mxu0 0
    %90 = vmatpush1.bf16.msra.mxu0 0
    %91 = vmatprep.subr.bf16.mxu0 0
    %92 = vmatpush1.bf16.msra.mxu0 0
    %93 = vmatprep.subr.bf16.mxu0 0
    %94 = vmatpush1.bf16.msra.mxu0 0
    %95 = vmatprep.subr.bf16.mxu0 0
    %96 = vmatpush1.bf16.msra.mxu0 0
    %97 = vmatprep.subr.bf16.mxu0 0
    %98 = vmatpush1.bf16.msra.mxu0 0
    %99 = vmatprep.subr.bf16.mxu0 0
    %100 = vmatpush1.bf16.msra.mxu0 0
    %101 = vmatprep.subr.bf16.mxu0 0
    %102 = vmatpush1.bf16.msra.mxu0 0
    %103 = vmatprep.subr.bf16.mxu0 0
    %104 = vmatpush1.bf16.msra.mxu0 0
    %105 = vmatprep.subr.bf16.mxu0 0
    %106 = vmatpush1.bf16.msra.mxu0 0
    %107 = vmatprep.subr.bf16.mxu0 0
    %108 = vmatpush1.bf16.msra.mxu0 0
    %109 = vmatprep.mubr.bf16.mxu0 0
    %110 = vmatmul.mubr.bf16.gmra.mrb[0].mxu0 %v75
    %v111 = vpop.f32.mrb[0].mxu0
    %v112 = vadd.f32 0.0, %v111
    %v113 = vpop.f32.mrb[0].mxu0
    %v114 = vpop.f32.mrb[0].mxu0
    %v115 = vadd.f32 0.0, %v114
    %v116 = vpop.f32.mrb[0].mxu0
    %117 = vdwg.mxu0
    %v118 = vadd.f32 %v48, %v112
    %v119 = vadd.f32 %v49, %v115
    %vm120 = vcmask 785408
    %121 = vst.msk [vmem:[#allocation2] sm:$0xff] %vm120, %v118
    %122 = vst.msk [vmem:[#allocation2 + $0x8] sm:$0xff] %vm120, %v119
    // Predicated region
    $region22: #{tpu_custom_call.1} parent=1 // pred_check
      %p123 = pneg %p41
    $region23: #{tpu_custom_call.1} parent=1 // pred_check_branch
      %125 = sbr.rel (%p123) target = $region25
    $region24: #{tpu_custom_call.1} parent=1 // pred_region
      %v126 = vld [vmem:[#allocation2] sm:$0xff]
      %v127 = vld [vmem:[#allocation2 + $0x8] sm:$0xff]
      %v128 = vpack.c.bf16 %v127, %v126
      %v130 = vunpack.c.l.b16 %v128
      %v131 = vunpack.c.h.b16 %v128
      %v132 = vpack.c.b16 %v130, %v130
      %v133 = vpack.c.b16 %v131, %v131
      %vm136 = vcmask 781312
      %137 = vst.msk [vmem:[#allocation8] sm:$0xf] %vm136, %v132
      %138 = vst.msk [vmem:[#allocation8 + $0x4] sm:$0xf] %vm136, %v133
    $region25: #{tpu_custom_call.1} parent=1 // pred_fallthru
      _
    // Predicated region
    $region26: #{tpu_custom_call.1} parent=1 // pred_check
      _
    $region27: #{tpu_custom_call.1} parent=1 // pred_check_branch
      %140 = sbr.rel (0) target = $region29
    $region28: #{tpu_custom_call.1} parent=1 // pred_region
      %s142 = ssub.s32 128, 128
      %143 = vsyncadd [#allocation5], %s142
      %s144 = sshll.u32 [#allocation8], 4
      %s145 = int_to_ptr.vmem [resolvable:$true] %s144
      %150 = dma.vmem_to_hbm [thread:$0]  %s145, 128, %s2, [#allocation5], 64, 64, 4
    $region29: #{tpu_custom_call.1} parent=1 // pred_fallthru
      _
    // Predicated region
    $region30: #{tpu_custom_call.1} parent=1 // pred_check
      _
    $region31: #{tpu_custom_call.1} parent=1 // pred_check_branch
      %152 = sbr.rel (0) target = $region33
    $region32: #{tpu_custom_call.1} parent=1 // pred_region
      %153 = dma.done [#allocation5], 128
    $region33: #{tpu_custom_call.1} parent=1 // pred_fallthru
      _
    %154 = vsyncpa [#allocation4], 1
    %155 = vsyncpa [#allocation7], 1
    %156 = vsyncpa [#allocation5], 1

</llo_original>
